<compile_context>
chip_gen: v5e
topology: v5e:2x2
jax: 0.10.0
libtpu: 0.0.40
codegen_flags: <defaults>
</compile_context>

<pallas_src>
import jax
import jax.numpy as jnp
from jax.experimental import pallas as pl
from jax.experimental.pallas import tpu as pltpu


# ----------------------------------------------------------------------------
# helpers
# ----------------------------------------------------------------------------
def _round_up(n, m=128):
    return ((n + m - 1) // m) * m


def _pad2d(w, rows, cols):
    w = jnp.asarray(w, jnp.float32)
    return jnp.pad(w, ((0, rows - w.shape[0]), (0, cols - w.shape[1])))


# ----------------------------------------------------------------------------
# fused Pallas kernel: per-crop GAP -> ONE backbone matmul -> ONE L2 norm ->
# ONE head matmul -> single full-width stores
# ----------------------------------------------------------------------------
def _make_fused_kernel(crop_batches, apply_l2_norm, has_head, return_feat):
    num_crops = len(crop_batches)

    def kernel(*refs):
        crop_refs = refs[:num_crops]
        i = num_crops
        # Small weight tiles, loaded ONCE.
        wb = refs[i][...]            # (C,  Dp)
        bb = refs[i + 1][...]        # (1,  Dp)
        i += 2
        wh = bh = None
        if has_head:
            wh = refs[i][...]        # (Dp, Kp)
            bh = refs[i + 1][...]    # (1,  Kp)
            i += 2
        if has_head and return_feat:
            feat_ref, out_ref = refs[i], refs[i + 1]
            i += 2
        else:
            feat_ref, out_ref = None, refs[i]
            i += 1
        pooled_ref = refs[i]         # VMEM scratch (n_tot, C)

        # ---- per-crop global-average-pool into the pooled scratch ----------
        # Only these tiny (b, C) VMEM-scratch writes are per-crop; everything
        # downstream (matmuls / norm / output stores) runs once over all rows.
        # TODO(synk): at real DINO scale pass crops as (B*C, HW) (C=3 fills
        # only 3/8 of each vreg's sublanes in this layout) and tile HW with a
        # grid axis, accumulating GAP partial sums with pl.when init/finalize.
        row = 0
        for cref, b in zip(crop_refs, crop_batches):     # static Python unroll
            hw = cref.shape[-1]
            pooled_ref[pl.ds(row, b), :] = (
                jnp.sum(cref[...], axis=-1) * jnp.float32(1.0 / hw))   # (b, C)
            row += b

        pooled = pooled_ref[...]                                   # (n_tot, C)

        # ---- batched backbone linear: single MXU pass, single bias bcast ----
        feat = jnp.dot(pooled, wb, preferred_element_type=jnp.float32) + bb
        if apply_l2_norm:
            # torch.nn.functional.normalize(p=2, eps=1e-12); rsqrt -> EUP.
            # Padded D columns are exactly zero, so the norm is exact.
            ssq = jnp.sum(feat * feat, axis=-1, keepdims=True)
            feat = feat * jax.lax.rsqrt(jnp.maximum(ssq, jnp.float32(1e-24)))

        # ---- single full-width (unmasked, lane-dense) stores ----------------
        if feat_ref is not None:
            feat_ref[...] = feat
        if has_head:
            # TODO(synk): at real DINO dims (K ~ 65536) cast feat/wh to bf16
            # (f32 accumulation, 256-aligned Dp/Kp tiles) for the v6e/v7x MXU;
            # v7x MXU has no int8 — use bf16/fp8 only.  Keep f32 at toy D=32.
            out_ref[...] = (
                jnp.dot(feat, wh, preferred_element_type=jnp.float32) + bh)
        else:
            out_ref[...] = feat

    return kernel


def _fused_forward(crops, wb_p, bb_p, head_p, apply_l2_norm, return_feat):
    # crops: list of (B_i, C, H_i, W_i) arrays (resolutions may differ).
    xs = [c.reshape(c.shape[0], c.shape[1], -1).astype(jnp.float32) for c in crops]
    batches = tuple(int(a.shape[0]) for a in xs)
    n_tot = sum(batches)
    c_dim = int(xs[0].shape[1])
    dp = int(wb_p.shape[1])
    has_head = head_p is not None

    in_arrays = list(xs) + [wb_p, bb_p]
    in_specs = [pl.BlockSpec(a.shape, lambda i: (0, 0, 0)) for a in xs]
    in_specs += [
        pl.BlockSpec(wb_p.shape, lambda i: (0, 0)),
        pl.BlockSpec(bb_p.shape, lambda i: (0, 0)),
    ]

    # Advisory cost estimate for XLA's scheduler around the custom call.
    flops = sum(a.shape[0] * a.shape[1] * a.shape[2] for a in xs)     # GAP adds
    flops += 2 * n_tot * c_dim * dp + 3 * n_tot * dp                  # backbone + norm
    bytes_accessed = sum(a.size for a in xs) * 4 + (wb_p.size + bb_p.size) * 4

    if has_head:
        wh_p, bh_p = head_p
        kp = int(wh_p.shape[1])
        in_arrays += [wh_p, bh_p]
        in_specs += [
            pl.BlockSpec(wh_p.shape, lambda i: (0, 0)),
            pl.BlockSpec(bh_p.shape, lambda i: (0, 0)),
        ]
        flops += 2 * n_tot * dp * kp
        bytes_accessed += (wh_p.size + bh_p.size) * 4 + n_tot * kp * 4
        if return_feat:
            bytes_accessed += n_tot * dp * 4
            out_shape = (
                jax.ShapeDtypeStruct((n_tot, dp), jnp.float32),
                jax.ShapeDtypeStruct((n_tot, kp), jnp.float32),
            )
            out_specs = (
                pl.BlockSpec((n_tot, dp), lambda i: (0, 0)),
                pl.BlockSpec((n_tot, kp), lambda i: (0, 0)),
            )
        else:
            out_shape = jax.ShapeDtypeStruct((n_tot, kp), jnp.float32)
            out_specs = pl.BlockSpec((n_tot, kp), lambda i: (0, 0))
    else:
        bytes_accessed += n_tot * dp * 4
        out_shape = jax.ShapeDtypeStruct((n_tot, dp), jnp.float32)
        out_specs = pl.BlockSpec((n_tot, dp), lambda i: (0, 0))

    kernel = _make_fused_kernel(
        batches, apply_l2_norm, has_head, return_feat and has_head)

    # TODO(synk): at real DINO scale (N in the hundreds, 224^2 spatial) replace
    # grid=(1,) with a (N_tile, HW_tile) grid: leading axis "parallel" (shards
    # across v7x's 2 TensorCores), HW axis "arbitrary" with pl.when-gated GAP
    # accumulation, constant-index weight BlockSpecs kept VMEM-resident, and
    # block sizes re-derived for v7x's 64 MiB VMEM (not v6e's 128 MiB).
    return pl.pallas_call(
        kernel,
        out_shape=out_shape,
        grid=(1,),
        in_specs=in_specs,
        out_specs=out_specs,
        scratch_shapes=[pltpu.VMEM((n_tot, c_dim), jnp.float32)],
        compiler_params=pltpu.CompilerParams(
            dimension_semantics=("arbitrary",),
            vmem_limit_bytes=32 * 1024 * 1024,
        ),
        cost_estimate=pl.CostEstimate(
            flops=int(flops),
            transcendentals=int(n_tot if apply_l2_norm else 0),
            bytes_accessed=int(bytes_accessed),
        ),
    )(*in_arrays)


# ----------------------------------------------------------------------------
# MultiCropWrapper (JAX / Pallas version)
# ----------------------------------------------------------------------------
class MultiCropWrapper:
    def __init__(self, backbone_params, head_params, apply_l2_norm=True):
        w_b, b_b = backbone_params          # (C, D), (D,)
        self.c, self.d = int(w_b.shape[0]), int(w_b.shape[1])
        self.dp = _round_up(self.d)         # lane-dense padded feature dim
        self.wb_p = _pad2d(w_b, self.c, self.dp)
        self.bb_p = _pad2d(jnp.asarray(b_b).reshape(1, -1), 1, self.dp)
        if head_params is not None:
            w_h, b_h = head_params          # (D, K), (K,)
            self.k = int(w_h.shape[1])
            self.kp = _round_up(self.k)
            # Zero rows D..Dp and cols K..Kp keep the padded math exact.
            # TODO(synk): at real DINO dims store head weights as bf16 in HBM
            # (halves weight DMA; v6e/v7x MXU is bf16-native, no int8 on v7x).
            wh_p = _pad2d(w_h, self.dp, self.kp)
            bh_p = _pad2d(jnp.asarray(b_h).reshape(1, -1), 1, self.kp)
            self.head_padded = (wh_p, bh_p)
        else:
            self.k = None
            self.kp = None
            self.head_padded = None
        self.apply_l2_norm = apply_l2_norm

    def __call__(self, x, mask=None, return_backbone_feat=False):
        if not isinstance(x, (list, tuple)):
            x = [x]
            mask = [mask] if mask is not None else None
        # TODO(synk): mask is forwarded to the backbone in the original module;
        # this synthetic GAP+linear backbone has no mask argument.
        # Note: torch's unique_consecutive grouping only batches backbone calls
        # per resolution; the fused kernel processes every crop (in order) in a
        # single launch, which is semantically identical for this backbone.
        crops = [jnp.asarray(c, jnp.float32) for c in x]
        has_head = self.head_padded is not None
        need_feat = return_backbone_feat and has_head

        result = _fused_forward(
            crops, self.wb_p, self.bb_p, self.head_padded,
            self.apply_l2_norm, need_feat,
        )

        # Slice off lane padding only when padding was actually added; at real
        # DINO dims (D, K multiples of 128) this is a no-op — no extra XLA op.
        def _trim(a, n, n_pad):
            return a if n == n_pad else a[:, :n]

        if has_head:
            if need_feat:
                feat_p, out_p = result
                return _trim(feat_p, self.d, self.dp), _trim(out_p, self.k, self.kp)
            return _trim(result, self.k, self.kp)
        feat = _trim(result, self.d, self.dp)
        return (feat, feat) if return_backbone_feat else feat


# ----------------------------------------------------------------------------
# main
# ----------------------------------------------------------------------------
if __name__ == "__main__":
    key = jax.random.PRNGKey(0)
    k_g, k_l, k_wb, k_bb, k_wh, k_bh = jax.random.split(key, 6)

    B, C, D, K = 2, 4, 32, 16   # batch per crop, channels, feat dim, head dim
    HG, HL = 16, 8              # global / local crop resolutions

    # two global crops (16x16) + two local crops (8x8)
    globals_ = jax.random.normal(k_g, (2, B, C, HG, HG), dtype=jnp.float32)
    locals_ = jax.random.normal(k_l, (2, B, C, HL, HL), dtype=jnp.float32)
    crops = [globals_[0], globals_[1], locals_[0], locals_[1]]

    # deterministic synthetic parameters
    w_b = jax.random.normal(k_wb, (C, D), dtype=jnp.float32) * 0.1
    b_b = jax.random.normal(k_bb, (D,), dtype=jnp.float32) * 0.01
    w_h = jax.random.normal(k_wh, (D, K), dtype=jnp.float32) * 0.1
    b_h = jax.random.normal(k_bh, (K,), dtype=jnp.float32) * 0.01

    model = MultiCropWrapper((w_b, b_b), (w_h, b_h), apply_l2_norm=True)
    out = jax.block_until_ready(model(crops))
    feat, out2 = model(crops, return_backbone_feat=True)
    feat = jax.block_until_ready(feat)
    out2 = jax.block_until_ready(out2)

    model_nohead = MultiCropWrapper((w_b, b_b), None, apply_l2_norm=True)
    feat_nh = jax.block_until_ready(model_nohead(crops))

    # reference check in plain JAX
    def ref_forward(crop_list):
        pooled = jnp.concatenate(
            [jnp.mean(c.reshape(c.shape[0], C, -1), axis=-1) for c in crop_list],
            axis=0,
        )
        f = pooled @ w_b + b_b
        fn = f / jnp.maximum(
            jnp.sqrt(jnp.sum(f * f, axis=-1, keepdims=True)), 1e-12
        )
        return fn, fn @ w_h + b_h

    ref_f, ref_o = ref_forward(crops)

    assert out.shape == (4 * B, K)
    assert jnp.allclose(out, ref_o, atol=1e-4, rtol=1e-4)
    assert jnp.allclose(out2, ref_o, atol=1e-4, rtol=1e-4)
    assert feat.shape == (4 * B, D)
    assert jnp.allclose(feat, ref_f, atol=1e-4, rtol=1e-4)
    assert jnp.allclose(feat_nh, ref_f, atol=1e-4, rtol=1e-4)
    print("KERNEL_OK")
</pallas_src>

<mosaic_0001>
module attributes {stable_mosaic.version = 11 : i64} {
  func.func @kernel(%arg0: i32, %arg1: memref<2x4x256xf32, #tpu.memory_space<vmem>>, %arg2: memref<2x4x256xf32, #tpu.memory_space<vmem>>, %arg3: memref<2x4x64xf32, #tpu.memory_space<vmem>>, %arg4: memref<2x4x64xf32, #tpu.memory_space<vmem>>, %arg5: memref<4x128xf32, #tpu.memory_space<vmem>>, %arg6: memref<1x128xf32, #tpu.memory_space<vmem>>, %arg7: memref<128x128xf32, #tpu.memory_space<vmem>>, %arg8: memref<1x128xf32, #tpu.memory_space<vmem>>, %arg9: memref<8x128xf32, #tpu.memory_space<vmem>>, %arg10: memref<8x4xf32, #tpu.memory_space<vmem>>) attributes {dimension_semantics = [#tpu.dimension_semantics<arbitrary>], iteration_bounds = array<i64: 1>, scalar_prefetch = 0 : i64, scratch_operands = 1 : i64, tpu.core_type = #tpu.core_type<tc>, window_params = [{pipeline_mode = #tpu.pipeline_mode<synchronous>, transform_indices = @transform_0, window_bounds = array<i64: 2, 4, 256>}, {pipeline_mode = #tpu.pipeline_mode<synchronous>, transform_indices = @transform_1, window_bounds = array<i64: 2, 4, 256>}, {pipeline_mode = #tpu.pipeline_mode<synchronous>, transform_indices = @transform_2, window_bounds = array<i64: 2, 4, 64>}, {pipeline_mode = #tpu.pipeline_mode<synchronous>, transform_indices = @transform_3, window_bounds = array<i64: 2, 4, 64>}, {pipeline_mode = #tpu.pipeline_mode<synchronous>, transform_indices = @transform_4, window_bounds = array<i64: 4, 128>}, {pipeline_mode = #tpu.pipeline_mode<synchronous>, transform_indices = @transform_5, window_bounds = array<i64: 1, 128>}, {pipeline_mode = #tpu.pipeline_mode<synchronous>, transform_indices = @transform_6, window_bounds = array<i64: 128, 128>}, {pipeline_mode = #tpu.pipeline_mode<synchronous>, transform_indices = @transform_7, window_bounds = array<i64: 1, 128>}, {pipeline_mode = #tpu.pipeline_mode<synchronous>, transform_indices = @transform_8, window_bounds = array<i64: 8, 128>}]} {
    %c0 = arith.constant 0 : index
    %c0_0 = arith.constant 0 : index
    %0 = vector.load %arg5[%c0, %c0_0] : memref<4x128xf32, #tpu.memory_space<vmem>>, vector<4x128xf32>
    %c0_1 = arith.constant 0 : index
    %c0_2 = arith.constant 0 : index
    %1 = vector.load %arg6[%c0_1, %c0_2] : memref<1x128xf32, #tpu.memory_space<vmem>>, vector<1x128xf32>
    %c0_3 = arith.constant 0 : index
    %c0_4 = arith.constant 0 : index
    %2 = vector.load %arg7[%c0_3, %c0_4] : memref<128x128xf32, #tpu.memory_space<vmem>>, vector<128x128xf32>
    %c0_5 = arith.constant 0 : index
    %c0_6 = arith.constant 0 : index
    %3 = vector.load %arg8[%c0_5, %c0_6] : memref<1x128xf32, #tpu.memory_space<vmem>>, vector<1x128xf32>
    %c0_7 = arith.constant 0 : index
    %c0_8 = arith.constant 0 : index
    %c0_9 = arith.constant 0 : index
    %4 = vector.load %arg1[%c0_7, %c0_8, %c0_9] : memref<2x4x256xf32, #tpu.memory_space<vmem>>, vector<2x4x256xf32>
    %cst = arith.constant dense<0.000000e+00> : vector<2x4xf32>
    %5 = vector.multi_reduction <add>, %4, %cst [2] : vector<2x4x256xf32> to vector<2x4xf32>
    %cst_10 = arith.constant 3.906250e-03 : f32
    %6 = vector.broadcast %cst_10 : f32 to vector<2x4xf32>
    %7 = arith.mulf %5, %6 : vector<2x4xf32>
    %c0_11 = arith.constant 0 : index
    %c0_12 = arith.constant 0 : index
    %8 = vector.load %arg10[%c0_11, %c0_12] : memref<8x4xf32, #tpu.memory_space<vmem>>, vector<2x4xf32>
    tpu.vector_store %arg10[%c0_11, %c0_12], %7 {strides = array<i32>} : memref<8x4xf32, #tpu.memory_space<vmem>>, vector<2x4xf32>,
    %c0_13 = arith.constant 0 : index
    %c0_14 = arith.constant 0 : index
    %c0_15 = arith.constant 0 : index
    %9 = vector.load %arg2[%c0_13, %c0_14, %c0_15] : memref<2x4x256xf32, #tpu.memory_space<vmem>>, vector<2x4x256xf32>
    %cst_16 = arith.constant dense<0.000000e+00> : vector<2x4xf32>
    %10 = vector.multi_reduction <add>, %9, %cst_16 [2] : vector<2x4x256xf32> to vector<2x4xf32>
    %cst_17 = arith.constant 3.906250e-03 : f32
    %11 = vector.broadcast %cst_17 : f32 to vector<2x4xf32>
    %12 = arith.mulf %10, %11 : vector<2x4xf32>
    %c2 = arith.constant 2 : index
    %c0_18 = arith.constant 0 : index
    %13 = vector.load %arg10[%c2, %c0_18] : memref<8x4xf32, #tpu.memory_space<vmem>>, vector<2x4xf32>
    tpu.vector_store %arg10[%c2, %c0_18], %12 {strides = array<i32>} : memref<8x4xf32, #tpu.memory_space<vmem>>, vector<2x4xf32>,
    %c0_19 = arith.constant 0 : index
    %c0_20 = arith.constant 0 : index
    %c0_21 = arith.constant 0 : index
    %14 = vector.load %arg3[%c0_19, %c0_20, %c0_21] : memref<2x4x64xf32, #tpu.memory_space<vmem>>, vector<2x4x64xf32>
    %cst_22 = arith.constant dense<0.000000e+00> : vector<2x4xf32>
    %15 = vector.multi_reduction <add>, %14, %cst_22 [2] : vector<2x4x64xf32> to vector<2x4xf32>
    %cst_23 = arith.constant 1.562500e-02 : f32
    %16 = vector.broadcast %cst_23 : f32 to vector<2x4xf32>
    %17 = arith.mulf %15, %16 : vector<2x4xf32>
    %c4 = arith.constant 4 : index
    %c0_24 = arith.constant 0 : index
    %18 = vector.load %arg10[%c4, %c0_24] : memref<8x4xf32, #tpu.memory_space<vmem>>, vector<2x4xf32>
    tpu.vector_store %arg10[%c4, %c0_24], %17 {strides = array<i32>} : memref<8x4xf32, #tpu.memory_space<vmem>>, vector<2x4xf32>,
    %c0_25 = arith.constant 0 : index
    %c0_26 = arith.constant 0 : index
    %c0_27 = arith.constant 0 : index
    %19 = vector.load %arg4[%c0_25, %c0_26, %c0_27] : memref<2x4x64xf32, #tpu.memory_space<vmem>>, vector<2x4x64xf32>
    %cst_28 = arith.constant dense<0.000000e+00> : vector<2x4xf32>
    %20 = vector.multi_reduction <add>, %19, %cst_28 [2] : vector<2x4x64xf32> to vector<2x4xf32>
    %cst_29 = arith.constant 1.562500e-02 : f32
    %21 = vector.broadcast %cst_29 : f32 to vector<2x4xf32>
    %22 = arith.mulf %20, %21 : vector<2x4xf32>
    %c6 = arith.constant 6 : index
    %c0_30 = arith.constant 0 : index
    %23 = vector.load %arg10[%c6, %c0_30] : memref<8x4xf32, #tpu.memory_space<vmem>>, vector<2x4xf32>
    tpu.vector_store %arg10[%c6, %c0_30], %22 {strides = array<i32>} : memref<8x4xf32, #tpu.memory_space<vmem>>, vector<2x4xf32>,
    %c0_31 = arith.constant 0 : index
    %c0_32 = arith.constant 0 : index
    %24 = vector.load %arg10[%c0_31, %c0_32] : memref<8x4xf32, #tpu.memory_space<vmem>>, vector<8x4xf32>
    %cst_33 = arith.constant dense<0.000000e+00> : vector<8x128xf32>
    %25 = tpu.matmul %24, %0, %cst_33 {dimension_numbers = #tpu.dot_dimension_numbers<[1], [0], [0], [1], [0, 0, 1, 1], [], []>} : vector<8x4xf32>, vector<4x128xf32>, vector<8x128xf32> -> vector<8x128xf32>
    %26 = vector.broadcast %1 : vector<1x128xf32> to vector<8x128xf32>
    %27 = arith.addf %25, %26 : vector<8x128xf32>
    %28 = arith.mulf %27, %27 : vector<8x128xf32>
    %cst_34 = arith.constant dense<0.000000e+00> : vector<8xf32>
    %29 = vector.multi_reduction <add>, %28, %cst_34 [1] : vector<8x128xf32> to vector<8xf32>
    %30 = vector.shape_cast %29 : vector<8xf32> to vector<8x1xf32>
    %cst_35 = arith.constant 1.000000e-24 : f32
    %31 = vector.broadcast %cst_35 : f32 to vector<8x1xf32>
    %32 = arith.maximumf %30, %31 : vector<8x1xf32>
    %33 = math.rsqrt %32 : vector<8x1xf32>
    %34 = vector.broadcast %33 : vector<8x1xf32> to vector<8x128xf32>
    %35 = arith.mulf %27, %34 : vector<8x128xf32>
    %cst_36 = arith.constant dense<0.000000e+00> : vector<8x128xf32>
    %36 = tpu.matmul %35, %2, %cst_36 {dimension_numbers = #tpu.dot_dimension_numbers<[1], [0], [0], [1], [0, 0, 1, 1], [], []>} : vector<8x128xf32>, vector<128x128xf32>, vector<8x128xf32> -> vector<8x128xf32>
    %37 = vector.broadcast %3 : vector<1x128xf32> to vector<8x128xf32>
    %38 = arith.addf %36, %37 : vector<8x128xf32>
    %c0_37 = arith.constant 0 : index
    %c0_38 = arith.constant 0 : index
    %39 = vector.load %arg9[%c0_37, %c0_38] : memref<8x128xf32, #tpu.memory_space<vmem>>, vector<8x128xf32>
    tpu.vector_store %arg9[%c0_37, %c0_38], %38 {strides = array<i32>} : memref<8x128xf32, #tpu.memory_space<vmem>>, vector<8x128xf32>,
    return
  }
  func.func @transform_0(%arg0: i32) -> (i32, i32, i32) {
    %c0_i32 = arith.constant 0 : i32
    %c0_i32_0 = arith.constant 0 : i32
    %c0_i32_1 = arith.constant 0 : i32
    %c0_i32_2 = arith.constant 0 : i32
    return %c0_i32, %c0_i32_0, %c0_i32_1 : i32, i32, i32
  }
  func.func @transform_1(%arg0: i32) -> (i32, i32, i32) {
    %c0_i32 = arith.constant 0 : i32
    %c0_i32_0 = arith.constant 0 : i32
    %c0_i32_1 = arith.constant 0 : i32
    %c0_i32_2 = arith.constant 0 : i32
    return %c0_i32, %c0_i32_0, %c0_i32_1 : i32, i32, i32
  }
  func.func @transform_2(%arg0: i32) -> (i32, i32, i32) {
    %c0_i32 = arith.constant 0 : i32
    %c0_i32_0 = arith.constant 0 : i32
    %c0_i32_1 = arith.constant 0 : i32
    %c0_i32_2 = arith.constant 0 : i32
    return %c0_i32, %c0_i32_0, %c0_i32_1 : i32, i32, i32
  }
  func.func @transform_3(%arg0: i32) -> (i32, i32, i32) {
    %c0_i32 = arith.constant 0 : i32
    %c0_i32_0 = arith.constant 0 : i32
    %c0_i32_1 = arith.constant 0 : i32
    %c0_i32_2 = arith.constant 0 : i32
    return %c0_i32, %c0_i32_0, %c0_i32_1 : i32, i32, i32
  }
  func.func @transform_4(%arg0: i32) -> (i32, i32) {
    %c0_i32 = arith.constant 0 : i32
    %c0_i32_0 = arith.constant 0 : i32
    %c0_i32_1 = arith.constant 0 : i32
    return %c0_i32, %c0_i32_0 : i32, i32
  }
  func.func @transform_5(%arg0: i32) -> (i32, i32) {
    %c0_i32 = arith.constant 0 : i32
    %c0_i32_0 = arith.constant 0 : i32
    %c0_i32_1 = arith.constant 0 : i32
    return %c0_i32, %c0_i32_0 : i32, i32
  }
  func.func @transform_6(%arg0: i32) -> (i32, i32) {
    %c0_i32 = arith.constant 0 : i32
    %c0_i32_0 = arith.constant 0 : i32
    %c0_i32_1 = arith.constant 0 : i32
    return %c0_i32, %c0_i32_0 : i32, i32
  }
  func.func @transform_7(%arg0: i32) -> (i32, i32) {
    %c0_i32 = arith.constant 0 : i32
    %c0_i32_0 = arith.constant 0 : i32
    %c0_i32_1 = arith.constant 0 : i32
    return %c0_i32, %c0_i32_0 : i32, i32
  }
  func.func @transform_8(%arg0: i32) -> (i32, i32) {
    %c0_i32 = arith.constant 0 : i32
    %c0_i32_0 = arith.constant 0 : i32
    %c0_i32_1 = arith.constant 0 : i32
    return %c0_i32, %c0_i32_0 : i32, i32
  }
}

</mosaic_0001>

<llo_original>
// kernel: tpu_custom_call.1
$region0: #{tpu_custom_call.1}
  #allocation0 [shape = 'u32[]', space=smem, size = 0x4, offset = 0x4, fixed_abs, tag = 'smem constant byte address 0x4 - core index']
  #allocation1 [shape = 'u32[72,128]{1,0:T(1,128)}', space=vmem, size = 0x9000, scoped, tag = 'internal scratch']
  #allocation2 [shape = 'f32[8,4]{1,0:T(8,128)}', space=vmem, size = 0x1000, scoped, tag = 'scratch operand']
  %s0 = inlined_call_operand.hbm [shape: f32[2,4,256], index: 0, kind: input, shape index: {}]
  %s1 = inlined_call_operand.hbm [shape: f32[2,4,256], index: 1, kind: input, shape index: {}]
  %s2 = inlined_call_operand.hbm [shape: f32[2,4,64], index: 2, kind: input, shape index: {}]
  %s3 = inlined_call_operand.hbm [shape: f32[2,4,64], index: 3, kind: input, shape index: {}]
  %s4 = inlined_call_operand.hbm [shape: f32[4,128], index: 4, kind: input, shape index: {}]
  %s5 = inlined_call_operand.vmem [shape: f32[1,128], index: 5, kind: input, shape index: {}]
  %s6 = inlined_call_operand.hbm [shape: f32[128,128], index: 6, kind: input, shape index: {}]
  %s7 = inlined_call_operand.vmem [shape: f32[1,128], index: 7, kind: input, shape index: {}]
  %s8 = inlined_call_operand.hbm [shape: f32[8,128], index: 8, kind: output, shape index: {}]
  %s9 = sld [smem:[#allocation0]]
  $region66: #{tpu_custom_call.1} parent=0
    _
  %s11 = ssub.s32 1, %s9
  %s12 = scalar_select 0, %s11, %s9
  $region1: #{tpu_custom_call.1} parent=0
    #allocation3 [shape = 'u8[8192]{0}', space=vmem, size = 0x2000, scoped, tag = 'input window, operand 0, single buffered']
    #allocation4 [shape = 's32[1]{0}', space=sflag, size = 0x4, scoped, tag = 'scoped memory for tpu_custom_call.1']
    #allocation5 [shape = 's32[1]{0}', space=sflag, size = 0x4, scoped, tag = 'scoped memory for tpu_custom_call.1']
    #allocation6 [shape = 'u8[8192]{0}', space=vmem, size = 0x2000, scoped, tag = 'input window, operand 1, single buffered']
    #allocation7 [shape = 's32[1]{0}', space=sflag, size = 0x4, scoped, tag = 'scoped memory for tpu_custom_call.1']
    #allocation8 [shape = 'u8[4096]{0}', space=vmem, size = 0x1000, scoped, tag = 'input window, operand 2, single buffered']
    #allocation9 [shape = 'u8[4096]{0}', space=vmem, size = 0x1000, scoped, tag = 'input window, operand 3, single buffered']
    #allocation10 [shape = 's32[1]{0}', space=sflag, size = 0x4, scoped, tag = 'scoped memory for tpu_custom_call.1']
    #allocation11 [shape = 'u8[2048]{0}', space=vmem, size = 0x800, scoped, tag = 'input window, operand 4, single buffered']
    #allocation12 [shape = 'u8[65536]{0}', space=vmem, size = 0x10000, scoped, tag = 'input window, operand 6, single buffered']
    #allocation13 [shape = 's32[1]{0}', space=sflag, size = 0x4, scoped, tag = 'scoped memory for tpu_custom_call.1']
    #allocation14 [shape = 'u8[4096]{0}', space=vmem, size = 0x1000, scoped, tag = 'output window, operand 0, single buffered']
    %13 = vsyncpa [#allocation4], 0
    %14 = vsyncpa [#allocation7], 0
    %15 = vsyncpa [#allocation10], 0
    %16 = vsyncpa [#allocation13], 0
    %17 = vsyncpa [#allocation5], 0
    // Predicated region
    $region2: #{tpu_custom_call.1} parent=1 // pred_check
      _
    $region3: #{tpu_custom_call.1} parent=1 // pred_check_branch
      %19 = sbr.rel (0) target = $region5
    $region4: #{tpu_custom_call.1} parent=1 // pred_region
      %21 = vsyncadd [#allocation4], 0
      %s22 = sshll.u32 %s0, 4
      %s23 = int_to_ptr.hbm [resolvable:$true] %s22
      %s24 = sshll.u32 [#allocation3], 4
      %s25 = int_to_ptr.vmem [resolvable:$true] %s24
      %30 = dma.hbm_to_vmem [thread:$0]  %s23, 256, %s25, [#allocation4], 128, 128, 8
    $region5: #{tpu_custom_call.1} parent=1 // pred_fallthru
      _
    // Predicated region
    $region6: #{tpu_custom_call.1} parent=1 // pred_check
      _
    $region7: #{tpu_custom_call.1} parent=1 // pred_check_branch
      %32 = sbr.rel (0) target = $region9
    $region8: #{tpu_custom_call.1} parent=1 // pred_region
      %34 = vsyncadd [#allocation7], 0
      %s35 = sshll.u32 %s1, 4
      %s36 = int_to_ptr.hbm [resolvable:$true] %s35
      %s37 = sshll.u32 [#allocation6], 4
      %s38 = int_to_ptr.vmem [resolvable:$true] %s37
      %43 = dma.hbm_to_vmem [thread:$0]  %s36, 256, %s38, [#allocation7], 128, 128, 8
    $region9: #{tpu_custom_call.1} parent=1 // pred_fallthru
      _
    // Predicated region
    $region10: #{tpu_custom_call.1} parent=1 // pred_check
      _
    $region11: #{tpu_custom_call.1} parent=1 // pred_check_branch
      %45 = sbr.rel (0) target = $region13
    $region12: #{tpu_custom_call.1} parent=1 // pred_region
      %47 = vsyncadd [#allocation7], 0
      %s48 = sshll.u32 %s2, 4
      %s49 = int_to_ptr.hbm [resolvable:$true] %s48
      %s50 = sshll.u32 [#allocation8], 4
      %s51 = int_to_ptr.vmem [resolvable:$true] %s50
      %56 = dma.hbm_to_vmem [thread:$0]  %s49, 128, %s51, [#allocation7], 64, 64, 4
    $region13: #{tpu_custom_call.1} parent=1 // pred_fallthru
      _
    // Predicated region
    $region14: #{tpu_custom_call.1} parent=1 // pred_check
      _
    $region15: #{tpu_custom_call.1} parent=1 // pred_check_branch
      %58 = sbr.rel (0) target = $region17
    $region16: #{tpu_custom_call.1} parent=1 // pred_region
      %60 = vsyncadd [#allocation10], 0
      %s61 = sshll.u32 %s3, 4
      %s62 = int_to_ptr.hbm [resolvable:$true] %s61
      %s63 = sshll.u32 [#allocation9], 4
      %s64 = int_to_ptr.vmem [resolvable:$true] %s63
      %69 = dma.hbm_to_vmem [thread:$0]  %s62, 128, %s64, [#allocation10], 64, 64, 4
    $region17: #{tpu_custom_call.1} parent=1 // pred_fallthru
      _
    // Predicated region
    $region18: #{tpu_custom_call.1} parent=1 // pred_check
      _
    $region19: #{tpu_custom_call.1} parent=1 // pred_check_branch
      %71 = sbr.rel (0) target = $region21
    $region20: #{tpu_custom_call.1} parent=1 // pred_region
      %73 = vsyncadd [#allocation10], 0
      %s75 = sshll.u32 %s4, 4
      %s76 = int_to_ptr.hbm [resolvable:$true] %s75
      %s77 = sshll.u32 [#allocation11], 4
      %s78 = int_to_ptr.vmem [resolvable:$true] %s77
      %80 = dma.hbm_to_vmem [thread:$0]  %s76, 64, %s78, [#allocation10]
    $region21: #{tpu_custom_call.1} parent=1 // pred_fallthru
      _
    // Predicated region
    $region22: #{tpu_custom_call.1} parent=1 // pred_check
      _
    $region23: #{tpu_custom_call.1} parent=1 // pred_check_branch
      %82 = sbr.rel (0) target = $region25
    $region24: #{tpu_custom_call.1} parent=1 // pred_region
      _
    $region25: #{tpu_custom_call.1} parent=1 // pred_fallthru
      _
    // Predicated region
    $region26: #{tpu_custom_call.1} parent=1 // pred_check
      _
    $region27: #{tpu_custom_call.1} parent=1 // pred_check_branch
      %84 = sbr.rel (0) target = $region29
    $region28: #{tpu_custom_call.1} parent=1 // pred_region
      %86 = vsyncadd [#allocation13], 0
      %s87 = sshll.u32 %s6, 4
      %s88 = int_to_ptr.hbm [resolvable:$true] %s87
      %s89 = sshll.u32 [#allocation12], 4
      %s90 = int_to_ptr.vmem [resolvable:$true] %s89
      %95 = dma.hbm_to_vmem [thread:$0]  %s88, 2048, %s90, [#allocation13], 128, 128, 8
    $region29: #{tpu_custom_call.1} parent=1 // pred_fallthru
      _
    // Predicated region
    $region30: #{tpu_custom_call.1} parent=1 // pred_check
      _
    $region31: #{tpu_custom_call.1} parent=1 // pred_check_branch
      %97 = sbr.rel (0) target = $region33
    $region32: #{tpu_custom_call.1} parent=1 // pred_region
      _
    $region33: #{tpu_custom_call.1} parent=1 // pred_fallthru
      _
    // Predicated region
    $region34: #{tpu_custom_call.1} parent=1 // pred_check
      _
    $region35: #{tpu_custom_call.1} parent=1 // pred_check_branch
      %99 = sbr.rel (0) target = $region37
    $region36: #{tpu_custom_call.1} parent=1 // pred_region
      %101 = dma.done [#allocation4], 256
    $region37: #{tpu_custom_call.1} parent=1 // pred_fallthru
      _
    // Predicated region
    $region38: #{tpu_custom_call.1} parent=1 // pred_check
      _
    $region39: #{tpu_custom_call.1} parent=1 // pred_check_branch
      %103 = sbr.rel (0) target = $region41
    $region40: #{tpu_custom_call.1} parent=1 // pred_region
      %105 = dma.done [#allocation7], 256
    $region41: #{tpu_custom_call.1} parent=1 // pred_fallthru
      _
    // Predicated region
    $region42: #{tpu_custom_call.1} parent=1 // pred_check
      _
    $region43: #{tpu_custom_call.1} parent=1 // pred_check_branch
      %107 = sbr.rel (0) target = $region45
    $region44: #{tpu_custom_call.1} parent=1 // pred_region
      %109 = dma.done [#allocation7], 128
    $region45: #{tpu_custom_call.1} parent=1 // pred_fallthru
      _
    // Predicated region
    $region46: #{tpu_custom_call.1} parent=1 // pred_check
      _
    $region47: #{tpu_custom_call.1} parent=1 // pred_check_branch
      %111 = sbr.rel (0) target = $region49
    $region48: #{tpu_custom_call.1} parent=1 // pred_region
      %113 = dma.done [#allocation10], 128
    $region49: #{tpu_custom_call.1} parent=1 // pred_fallthru
      _
    // Predicated region
    $region50: #{tpu_custom_call.1} parent=1 // pred_check
      _
    $region51: #{tpu_custom_call.1} parent=1 // pred_check_branch
      %115 = sbr.rel (0) target = $region53
    $region52: #{tpu_custom_call.1} parent=1 // pred_region
      %117 = dma.done [#allocation10], 64
    $region53: #{tpu_custom_call.1} parent=1 // pred_fallthru
      _
    // Predicated region
    $region54: #{tpu_custom_call.1} parent=1 // pred_check
      _
    $region55: #{tpu_custom_call.1} parent=1 // pred_check_branch
      %119 = sbr.rel (0) target = $region57
    $region56: #{tpu_custom_call.1} parent=1 // pred_region
      %121 = dma.done [#allocation13], 2048
    $region57: #{tpu_custom_call.1} parent=1 // pred_fallthru
      _
    %v122 = vld [vmem:[#allocation11] sm:$0xf]
    %v123 = vld [vmem:[%s5] sm:$0x1]
    %v124 = vld [vmem:[#allocation12] sm:$0xff]
    %v125 = vld [vmem:[#allocation12 + $0x8] sm:$0xff]
    %v126 = vld [vmem:[#allocation12 + $0x10] sm:$0xff]
    %v127 = vld [vmem:[#allocation12 + $0x18] sm:$0xff]
    %v128 = vld [vmem:[#allocation12 + $0x20] sm:$0xff]
    %v129 = vld [vmem:[#allocation12 + $0x28] sm:$0xff]
    %v130 = vld [vmem:[#allocation12 + $0x30] sm:$0xff]
    %v131 = vld [vmem:[#allocation12 + $0x38] sm:$0xff]
    %v132 = vld [vmem:[#allocation12 + $0x40] sm:$0xff]
    %v133 = vld [vmem:[#allocation12 + $0x48] sm:$0xff]
    %v134 = vld [vmem:[#allocation12 + $0x50] sm:$0xff]
    %v135 = vld [vmem:[#allocation12 + $0x58] sm:$0xff]
    %v136 = vld [vmem:[#allocation12 + $0x60] sm:$0xff]
    %v137 = vld [vmem:[#allocation12 + $0x68] sm:$0xff]
    %v138 = vld [vmem:[#allocation12 + $0x70] sm:$0xff]
    %v139 = vld [vmem:[#allocation12 + $0x78] sm:$0xff]
    %v140 = vld [vmem:[%s7] sm:$0x1]
    %v141 = vld [vmem:[#allocation3] sm:$0xff]
    %v142 = vld [vmem:[#allocation3 + $0x8] sm:$0xff]
    %145 = vst [vmem:[#allocation1] ss:$2 sm:$0xff] %v141
    %v146 = vld.sshfl [vmem:[#allocation1] sm:$0xff pattern:$0x75316420]
    %v147 = vld.sshfl [vmem:[#allocation1 + $0x8] sm:$0xff pattern:$0x75316420]
    %s148 = scalar_lea.vmem [#allocation1], 16
    %149 = vst [vmem:[%s148] ss:$2 sm:$0xff] %v142
    %v150 = vld.sshfl [vmem:[#allocation1 + $0x10] sm:$0xff pattern:$0x75316420]
    %v151 = vld.sshfl [vmem:[#allocation1 + $0x18] sm:$0xff pattern:$0x75316420]
    %vm156 = vcmask 1043456
    %v157 = vsel %vm156, %v146, 0.0
    %v158 = vsel %vm156, %v147, 0.0
    %v159 = vadd.f32 %v157, %v158
    %160 = vadd.xlane.f32.xlu0 %v159
    %v161 = vpop.xlane.xlu0 %160
    %v162 = vsel %vm156, %v150, 0.0
    %v163 = vsel %vm156, %v151, 0.0
    %v164 = vadd.f32 %v162, %v163
    %165 = vadd.xlane.f32.xlu0 %v164
    %v166 = vpop.xlane.xlu0 %165
    %v167 = vmul.f32 %v161, 0.00390625
    %v168 = vmul.f32 %v166, 0.00390625
    %v171 = vlaneseq
    %v172 = vand.u32 %v171, 127
    %v173 = vperm.slane %v167, %v172
    %v174 = vperm.slane %v168, %v172
    %vm175 = vcmask 1041409
    %v176 = vsel %vm175, %v174, %v173
    %vm178 = vcmask 25600
    %179 = vst.msk [vmem:[#allocation2] sm:$0x3] %vm178, %v176
    %v180 = vld [vmem:[#allocation6] sm:$0xff]
    %v181 = vld [vmem:[#allocation6 + $0x8] sm:$0xff]
    %184 = vst [vmem:[#allocation1] ss:$2 sm:$0xff] %v180
    %v185 = vld.sshfl [vmem:[#allocation1] sm:$0xff pattern:$0x75316420]
    %v186 = vld.sshfl [vmem:[#allocation1 + $0x8] sm:$0xff pattern:$0x75316420]
    %s187 = scalar_lea.vmem [#allocation1], 16
    %188 = vst [vmem:[%s187] ss:$2 sm:$0xff] %v181
    %v189 = vld.sshfl [vmem:[#allocation1 + $0x10] sm:$0xff pattern:$0x75316420]
    %v190 = vld.sshfl [vmem:[#allocation1 + $0x18] sm:$0xff pattern:$0x75316420]
    %v195 = vsel %vm156, %v185, 0.0
    %v196 = vsel %vm156, %v186, 0.0
    %v197 = vadd.f32 %v195, %v196
    %198 = vadd.xlane.f32.xlu0 %v197
    %v199 = vpop.xlane.xlu0 %198
    %v200 = vsel %vm156, %v189, 0.0
    %v201 = vsel %vm156, %v190, 0.0
    %v202 = vadd.f32 %v200, %v201
    %203 = vadd.xlane.f32.xlu0 %v202
    %v204 = vpop.xlane.xlu0 %203
    %v205 = vmul.f32 %v199, 0.00390625
    %v206 = vmul.f32 %v204, 0.00390625
    %v209 = vperm.slane %v205, %v172
    %v210 = vperm.slane %v206, %v172
    %v211 = vsel %vm175, %v210, %v209
    %213 = vst.msk [vmem:[#allocation2 + $0x2] sm:$0x3] %vm178, %v211
    %v214 = vld [vmem:[#allocation8] sm:$0xf]
    %v215 = vld [vmem:[#allocation8 + $0x4] sm:$0xf]
    %vm216 = vcmask 519168
    %v217 = vsel %vm216, %v214, 0.0
    %218 = vadd.xlane.f32.xlu0 %v217
    %v219 = vpop.xlane.xlu0 %218
    %v220 = vsel %vm216, %v215, 0.0
    %221 = vadd.xlane.f32.xlu0 %v220
    %v222 = vpop.xlane.xlu0 %221
    %v223 = vmul.f32 %v219, 0.015625
    %v224 = vmul.f32 %v222, 0.015625
    %v227 = vperm.slane %v223, %v172
    %v228 = vperm.slane %v224, %v172
    %v229 = vsel %vm175, %v228, %v227
    %231 = vst.msk [vmem:[#allocation2 + $0x4] sm:$0x3] %vm178, %v229
    %v232 = vld [vmem:[#allocation9] sm:$0xf]
    %v233 = vld [vmem:[#allocation9 + $0x4] sm:$0xf]
    %v234 = vsel %vm216, %v232, 0.0
    %235 = vadd.xlane.f32.xlu0 %v234
    %v236 = vpop.xlane.xlu0 %235
    %v237 = vsel %vm216, %v233, 0.0
    %238 = vadd.xlane.f32.xlu0 %v237
    %v239 = vpop.xlane.xlu0 %238
    %v240 = vmul.f32 %v236, 0.015625
    %v241 = vmul.f32 %v239, 0.015625
    %v244 = vperm.slane %v240, %v172
    %v245 = vperm.slane %v241, %v172
    %v246 = vsel %vm175, %v245, %v244
    %248 = vst.msk [vmem:[#allocation2 + $0x6] sm:$0x3] %vm178, %v246
    %v249 = vld [vmem:[#allocation2] sm:$0xff]
    %v251 = vperm.slane %v123, 0
    %vm253 = vcmask 31744
    %v255 = vsel %vm253, %v249, 0
    %v258 = vsel %vm156, %v122, 0
    %260 = vmatpush.msra.mxu0 0.0
    %261 = vmatpush.msra.mxu0 0.0
    %262 = vmatpush.msra.mxu0 0.0
    %263 = vmatpush.msra.mxu0 0.0
    %264 = vmatpush.msra.mxu0 0.0
    %265 = vmatpush.msra.mxu0 0.0
    %266 = vmatpush.msra.mxu0 0.0
    %267 = vmatpush.msra.mxu0 0.0
    %268 = vmatpush.msra.mxu0 0.0
    %269 = vmatpush.msra.mxu0 0.0
    %270 = vmatpush.msra.mxu0 0.0
    %271 = vmatpush.msra.mxu0 0.0
    %272 = vmatpush.msra.mxu0 0.0
    %273 = vmatpush.msra.mxu0 0.0
    %274 = vmatpush.msra.mxu0 0.0
    %275 = vmatpush.msra.mxu0 %v258
    %276 = vmatmul.f32.gmra.mxu0 %v255
    %v277 = vpop.f32.mrf.mxu0
    %v278 = vadd.f32 %v251, %v277
    %279 = vdwg.mxu0
    %v280 = vmul.f32 %v278, %v278
    %281 = vadd.xlane.f32.xlu0 %v280
    %v282 = vpop.xlane.xlu0 %281
    %v283 = vmax.f32 %v282, 1e-24
    %v284 = vrsqrt.pop %v283
    %v285 = vmul.f32 %v284, %v283
    %v286 = vmul.f32 %v285, %v284
    %v287 = vmul.f32 0.5, %v286
    %v288 = vsub.f32 1.5, %v287
    %v289 = vmul.f32 %v284, %v288
    %vm290 = vweird.f32 %v283
    %vm291 = vweird.f32 %v284
    %vm292 = vmor %vm290, %vm291
    %v293 = vsel %vm292, %v284, %v289
    %v294 = vmul.f32 %v278, %v293
    %v296 = vperm.slane %v140, 0
    %298 = vmatpush.msra.mxu0 %v139
    %299 = vmatpush.msra.mxu0 %v138
    %300 = vmatpush.msra.mxu0 %v137
    %301 = vmatpush.msra.mxu0 %v136
    %302 = vmatpush.msra.mxu0 %v135
    %303 = vmatpush.msra.mxu0 %v134
    %304 = vmatpush.msra.mxu0 %v133
    %305 = vmatpush.msra.mxu0 %v132
    %306 = vmatpush.msra.mxu0 %v131
    %307 = vmatpush.msra.mxu0 %v130
    %308 = vmatpush.msra.mxu0 %v129
    %309 = vmatpush.msra.mxu0 %v128
    %310 = vmatpush.msra.mxu0 %v127
    %311 = vmatpush.msra.mxu0 %v126
    %312 = vmatpush.msra.mxu0 %v125
    %313 = vmatpush.msra.mxu0 %v124
    %314 = vmatmul.f32.gmra.mxu0 %v294
    %v315 = vpop.f32.mrf.mxu0
    %v316 = vadd.f32 %v296, %v315
    %317 = vdwg.mxu0
    %318 = vst [vmem:[#allocation14] sm:$0xff] %v316
    // Predicated region
    $region58: #{tpu_custom_call.1} parent=1 // pred_check
      _
    $region59: #{tpu_custom_call.1} parent=1 // pred_check_branch
      %320 = sbr.rel (0) target = $region61
    $region60: #{tpu_custom_call.1} parent=1 // pred_region
      %322 = vsyncadd [#allocation5], 0
      %s324 = sshll.u32 [#allocation14], 4
      %s325 = int_to_ptr.vmem [resolvable:$true] %s324
      %s326 = sshll.u32 %s8, 4
      %s327 = int_to_ptr.hbm [resolvable:$true] %s326
      %329 = dma.vmem_to_hbm [thread:$0]  %s325, 128, %s327, [#allocation5]
    $region61: #{tpu_custom_call.1} parent=1 // pred_fallthru
      _
    // Predicated region
    $region62: #{tpu_custom_call.1} parent=1 // pred_check
      _
    $region63: #{tpu_custom_call.1} parent=1 // pred_check_branch
      %331 = sbr.rel (0) target = $region65
    $region64: #{tpu_custom_call.1} parent=1 // pred_region
      %333 = dma.done [#allocation5], 128
    $region65: #{tpu_custom_call.1} parent=1 // pred_fallthru
      _
    %334 = vsyncpa [#allocation4], 1
    %335 = vsyncpa [#allocation7], 1
    %336 = vsyncpa [#allocation10], 1
    %337 = vsyncpa [#allocation13], 1
    %338 = vsyncpa [#allocation5], 1

</llo_original>
